<compile_context>
chip_gen: v7x
topology: tpu7x:2x2x1
jax: 0.10.0
libtpu: 0.0.40
codegen_flags: <defaults>
</compile_context>

<pallas_src>
import functools

import jax
import jax.numpy as jnp
from jax.experimental import pallas as pl
from jax.experimental.pallas import tpu as pltpu


def _masked_mean_kernel(x_ref, m_ref, out_ref, sum_acc, den_acc, *, normalize):
    # x_ref:   (TB, TS, E)  native dtype (e.g. bf16)
    # m_ref:   (TB, TS, 1)  bf16 0/1 mask
    # out_ref: (TB, E)      float32
    s = pl.program_id(1)

    @pl.when(s == 0)
    def _():
        sum_acc[...] = jnp.zeros_like(sum_acc)
        den_acc[...] = jnp.zeros_like(den_acc)

    x = x_ref[...]                              # keep native dtype; no f32 block copy
    m = m_ref[...]                              # (TB, TS, 1)

    # 0/1 mask multiply is exact in the native dtype; upcast only for the
    # f32 accumulation (VPU reduce over the sublane/sequence axis).
    masked = (x * m.astype(x.dtype)).astype(jnp.float32)
    sum_acc[...] += jnp.sum(masked, axis=1)                     # (TB, E)
    den_acc[...] += jnp.sum(m.astype(jnp.float32), axis=1)      # (TB, 1)

    @pl.when(s == pl.num_programs(1) - 1)
    def _():
        total = sum_acc[...]
        den = den_acc[...]
        if normalize:
            # Per-row scale cancels under L2 normalization, so the approximate
            # EUP reciprocal is numerically safe here.
            embed = total * pl.reciprocal(den, approx=True)
            sumsq = jnp.sum(embed * embed, axis=1, keepdims=True)
            # F.normalize(p=2, dim=1, eps=1e-12): x / max(||x||, 1e-12)
            embed = embed * jax.lax.rsqrt(jnp.maximum(sumsq, 1e-24))
        else:
            embed = total / den                 # exact division (matches torch.div)
        out_ref[...] = embed                    # single lane-dense (TB, E) store


def _round_up(v, m):
    return (v + m - 1) // m * m


def _default_budget_bytes():
    # Whole per-step working-set budget (double-buffered x + lane-padded mask
    # blocks, fused temporaries, accumulators).  Kept well under the smallest
    # default scoped-VMEM limit across generations (16 MiB v5e; 32 MiB v6e/v7x,
    # where v7x only has 64 MiB physical so raising vmem_limit_bytes is not a
    # safe escape hatch).
    try:
        cap = pltpu.get_tpu_info().vmem_capacity_bytes
    except Exception:
        cap = 64 << 20
    return min(cap // 6, 10 << 20)


def _footprint_bytes(tb, ts, E, x_item, m_item):
    ts8 = _round_up(ts, 8)
    e128 = _round_up(E, 128)
    x_blk = tb * ts8 * e128 * x_item            # one x buffer
    m_blk = tb * ts8 * 128 * m_item             # (tb,ts,1) lane-pads out to 128
    acc = _round_up(tb, 8) * (e128 + 128) * 4   # f32 accumulators
    temp = x_blk                                # headroom for fused temporaries
    return 2 * x_blk + 2 * m_blk + temp + acc   # both inputs double-buffered


_TS_CANDIDATES = (2048, 1024, 512, 256, 128, 64, 32, 16, 8)


def _pick_ts(S, tb, E, x_item, m_item, budget_bytes):
    s8 = _round_up(S, 8)
    for cand in _TS_CANDIDATES:
        if cand > s8:
            continue
        if _footprint_bytes(tb, cand, E, x_item, m_item) > budget_bytes:
            continue
        # Accept at most ~12.5% zero-padding overhead on the streamed bytes.
        if _round_up(S, cand) * 8 <= s8 * 9:
            return cand
    # Graceful fallback: smallest legal tile (for extreme E even this may bust
    # the budget; rely on the default scoped limit / explicit vmem_limit_bytes).
    return 8


def masked_mean(x, mask, normalize=True, tb=None, ts=None, vmem_limit_bytes=None):
    """x: (B, S, E) float; mask: (B, 1, S) 0/1. Returns (B, E) float32."""
    B, S, E = x.shape
    assert mask.shape == (B, 1, S), (x.shape, mask.shape)

    # (B,1,S) -> (B,S,1) so S sits on the sublane axis like x.  bf16 is exact
    # for a 0/1 padding mask and halves the lane-padded mask DMA/VMEM footprint.
    m = jnp.transpose(mask, (0, 2, 1)).astype(jnp.bfloat16)

    x_item = jnp.dtype(x.dtype).itemsize
    m_item = jnp.dtype(m.dtype).itemsize
    budget = _default_budget_bytes()

    # Batch tiling: tb=8 satisfies the (8,128) output-tiling rule, keeps the
    # "parallel" batch axis >= 2 for B >= 16 (both v7x TensorCores busy) and
    # avoids the degenerate tb=B path; B is zero-padded up to a multiple of 8
    # when needed (padded rows have mask==0 and are sliced off below).
    # TODO(synk): for B <= 8 the batch grid is 1 and one v7x TensorCore idles;
    # splitting the sequence reduction across cores would need a second combine
    # pass and is not implemented here.
    Bp = B if B <= 8 else _round_up(B, 8)
    if tb is None:
        tb = Bp if Bp <= 8 else 8
    assert Bp % tb == 0, (B, Bp, tb)

    # Sequence tiling: largest power-of-two tile whose (double-buffered,
    # lane-padded) working set fits the VMEM budget; S is zero-padded up to a
    # multiple of the tile (zero mask rows are numerically inert).
    if ts is None:
        ts = _pick_ts(S, tb, E, x_item, m_item, budget)
    Sp = _round_up(S, max(ts, 8))
    assert Sp % ts == 0, (S, Sp, ts)

    if Bp != B or Sp != S:
        x = jnp.pad(x, ((0, Bp - B), (0, Sp - S), (0, 0)))
        m = jnp.pad(m, ((0, Bp - B), (0, Sp - S), (0, 0)))

    grid = (Bp // tb, Sp // ts)
    kernel = functools.partial(_masked_mean_kernel, normalize=normalize)

    cp_kwargs = dict(dimension_semantics=("parallel", "arbitrary"))
    if vmem_limit_bytes is not None:
        cp_kwargs["vmem_limit_bytes"] = vmem_limit_bytes

    cost = pl.CostEstimate(
        flops=2 * Bp * Sp * E,
        transcendentals=2 * Bp if normalize else 0,
        bytes_accessed=Bp * Sp * E * x_item + Bp * Sp * m_item + Bp * E * 4,
    )

    out = pl.pallas_call(
        kernel,
        out_shape=jax.ShapeDtypeStruct((Bp, E), jnp.float32),
        grid_spec=pltpu.PrefetchScalarGridSpec(
            num_scalar_prefetch=0,
            grid=grid,
            in_specs=[
                pl.BlockSpec((tb, ts, E), lambda b, s: (b, s, 0)),
                pl.BlockSpec((tb, ts, 1), lambda b, s: (b, s, 0)),
            ],
            out_specs=pl.BlockSpec((tb, E), lambda b, s: (b, 0)),
            scratch_shapes=[
                pltpu.VMEM((tb, E), jnp.float32),   # running masked sum
                pltpu.VMEM((tb, 1), jnp.float32),   # running token count
            ],
        ),
        compiler_params=pltpu.CompilerParams(**cp_kwargs),
        cost_estimate=cost,
    )(x, m)

    return out[:B] if Bp != B else out


if __name__ == "__main__":
    def reference(x, mask):
        B, S, E = x.shape
        xf = x.astype(jnp.float32)
        m2 = mask.reshape(B, S).astype(jnp.float32)
        mean = jnp.sum(xf * m2[:, :, None], axis=1) / jnp.sum(m2, axis=1, keepdims=True)
        nrm = mean / jnp.maximum(
            jnp.sqrt(jnp.sum(mean * mean, axis=1, keepdims=True)), 1e-12)
        return mean, nrm

    def make_case(key, B, S, E, dtype):
        kx, kl = jax.random.split(key)
        x = jax.random.normal(kx, (B, S, E), dtype=jnp.float32).astype(dtype)
        lengths = jax.random.randint(kl, (B,), 1, S + 1)
        pos = jnp.arange(S)[None, :]
        mask = (pos < lengths[:, None]).astype(jnp.float32).reshape(B, 1, S)
        return x, mask

    key = jax.random.PRNGKey(0)

    # Case 1: small aligned shapes, explicit tiles, both normalize modes.
    x1, mask1 = make_case(key, 2, 16, 128, jnp.bfloat16)
    out_n = jax.block_until_ready(masked_mean(x1, mask1, normalize=True, tb=2, ts=8))
    out_u = jax.block_until_ready(masked_mean(x1, mask1, normalize=False, tb=2, ts=8))
    ref_u, ref_n = reference(x1, mask1)
    assert out_n.shape == (2, 128) and out_u.shape == (2, 128)
    assert jnp.allclose(out_u, ref_u, atol=1e-5, rtol=1e-5)
    assert jnp.allclose(out_n, ref_n, atol=1e-4, rtol=1e-4)

    # Case 2: default tile-picking path on the same shapes.
    out_d = jax.block_until_ready(masked_mean(x1, mask1, normalize=True))
    assert jnp.allclose(out_d, ref_n, atol=1e-4, rtol=1e-4)

    # Case 3: unaligned B (<=8) and S exercise the sequence zero-padding path.
    x2, mask2 = make_case(jax.random.PRNGKey(1), 3, 13, 256, jnp.float32)
    out2 = jax.block_until_ready(masked_mean(x2, mask2, normalize=True))
    _, ref2 = reference(x2, mask2)
    assert out2.shape == (3, 256)
    assert jnp.allclose(out2, ref2, atol=1e-4, rtol=1e-4)

    # Case 4: B > 8 and not a multiple of 8 exercises batch padding + tb=8.
    x3, mask3 = make_case(jax.random.PRNGKey(2), 10, 24, 128, jnp.bfloat16)
    out3 = jax.block_until_ready(masked_mean(x3, mask3, normalize=False))
    ref3, _ = reference(x3, mask3)
    assert out3.shape == (10, 128)
    assert jnp.allclose(out3, ref3, atol=1e-5, rtol=1e-5)

    print("KERNEL_OK")
</pallas_src>

<mosaic_0001>
module attributes {stable_mosaic.version = 11 : i64} {
  func.func @_masked_mean_kernel(%arg0: i32, %arg1: i32, %arg2: memref<2x8x128xbf16, #tpu.memory_space<vmem>>, %arg3: memref<2x8x1xbf16, #tpu.memory_space<vmem>>, %arg4: memref<2x128xf32, #tpu.memory_space<vmem>>, %arg5: memref<2x128xf32, #tpu.memory_space<vmem>>, %arg6: memref<2x1xf32, #tpu.memory_space<vmem>>) attributes {dimension_semantics = [#tpu.dimension_semantics<parallel>, #tpu.dimension_semantics<arbitrary>], iteration_bounds = array<i64: 1, 2>, scalar_prefetch = 0 : i64, scratch_operands = 2 : i64, tpu.core_type = #tpu.core_type<tc>, window_params = [{transform_indices = @transform_0, window_bounds = array<i64: 2, 8, 128>}, {transform_indices = @transform_1, window_bounds = array<i64: 2, 8, 1>}, {transform_indices = @transform_2, window_bounds = array<i64: 2, 128>}]} {
    %c0_i32 = arith.constant 0 : i32
    %0 = arith.cmpi eq, %arg1, %c0_i32 : i32
    %1 = arith.extui %0 : i1 to i32
    %c0_i32_0 = arith.constant 0 : i32
    %2 = arith.cmpi ne, %1, %c0_i32_0 : i32
    scf.if %2 {
      %cst_16 = arith.constant 0.000000e+00 : f32
      %20 = vector.broadcast %cst_16 : f32 to vector<2x128xf32>
      %c0_17 = arith.constant 0 : index
      %c0_18 = arith.constant 0 : index
      %21 = vector.load %arg5[%c0_17, %c0_18] : memref<2x128xf32, #tpu.memory_space<vmem>>, vector<2x128xf32>
      tpu.vector_store %arg5[%c0_17, %c0_18], %20 {strides = array<i32>} : memref<2x128xf32, #tpu.memory_space<vmem>>, vector<2x128xf32>,
      %cst_19 = arith.constant 0.000000e+00 : f32
      %22 = vector.broadcast %cst_19 : f32 to vector<2x1xf32>
      %c0_20 = arith.constant 0 : index
      %c0_21 = arith.constant 0 : index
      %23 = vector.load %arg6[%c0_20, %c0_21] : memref<2x1xf32, #tpu.memory_space<vmem>>, vector<2x1xf32>
      tpu.vector_store %arg6[%c0_20, %c0_21], %22 {strides = array<i32>} : memref<2x1xf32, #tpu.memory_space<vmem>>, vector<2x1xf32>,
    } else {
    }
    %c0 = arith.constant 0 : index
    %c0_1 = arith.constant 0 : index
    %c0_2 = arith.constant 0 : index
    %3 = vector.load %arg2[%c0, %c0_1, %c0_2] : memref<2x8x128xbf16, #tpu.memory_space<vmem>>, vector<2x8x128xbf16>
    %c0_3 = arith.constant 0 : index
    %c0_4 = arith.constant 0 : index
    %c0_5 = arith.constant 0 : index
    %4 = vector.load %arg3[%c0_3, %c0_4, %c0_5] : memref<2x8x1xbf16, #tpu.memory_space<vmem>>, vector<2x8x1xbf16>
    %5 = vector.broadcast %4 : vector<2x8x1xbf16> to vector<2x8x128xbf16>
    %6 = arith.mulf %3, %5 : vector<2x8x128xbf16>
    %7 = arith.extf %6 : vector<2x8x128xbf16> to vector<2x8x128xf32>
    %c0_6 = arith.constant 0 : index
    %c0_7 = arith.constant 0 : index
    %8 = vector.load %arg5[%c0_6, %c0_7] : memref<2x128xf32, #tpu.memory_space<vmem>>, vector<2x128xf32>
    %cst = arith.constant dense<0.000000e+00> : vector<2x128xf32>
    %9 = vector.multi_reduction <add>, %7, %cst [1] : vector<2x8x128xf32> to vector<2x128xf32>
    %10 = arith.addf %8, %9 : vector<2x128xf32>
    %c0_8 = arith.constant 0 : index
    %c0_9 = arith.constant 0 : index
    %11 = vector.load %arg5[%c0_8, %c0_9] : memref<2x128xf32, #tpu.memory_space<vmem>>, vector<2x128xf32>
    tpu.vector_store %arg5[%c0_8, %c0_9], %10 {strides = array<i32>} : memref<2x128xf32, #tpu.memory_space<vmem>>, vector<2x128xf32>,
    %c0_10 = arith.constant 0 : index
    %c0_11 = arith.constant 0 : index
    %12 = vector.load %arg6[%c0_10, %c0_11] : memref<2x1xf32, #tpu.memory_space<vmem>>, vector<2x1xf32>
    %13 = arith.extf %4 : vector<2x8x1xbf16> to vector<2x8x1xf32>
    %cst_12 = arith.constant dense<0.000000e+00> : vector<2x1xf32>
    %14 = vector.multi_reduction <add>, %13, %cst_12 [1] : vector<2x8x1xf32> to vector<2x1xf32>
    %15 = arith.addf %12, %14 : vector<2x1xf32>
    %c0_13 = arith.constant 0 : index
    %c0_14 = arith.constant 0 : index
    %16 = vector.load %arg6[%c0_13, %c0_14] : memref<2x1xf32, #tpu.memory_space<vmem>>, vector<2x1xf32>
    tpu.vector_store %arg6[%c0_13, %c0_14], %15 {strides = array<i32>} : memref<2x1xf32, #tpu.memory_space<vmem>>, vector<2x1xf32>,
    %c1_i32 = arith.constant 1 : i32
    %17 = arith.cmpi eq, %arg1, %c1_i32 : i32
    %18 = arith.extui %17 : i1 to i32
    %c0_i32_15 = arith.constant 0 : i32
    %19 = arith.cmpi ne, %18, %c0_i32_15 : i32
    scf.if %19 {
      %c0_16 = arith.constant 0 : index
      %c0_17 = arith.constant 0 : index
      %20 = vector.load %arg5[%c0_16, %c0_17] : memref<2x128xf32, #tpu.memory_space<vmem>>, vector<2x128xf32>
      %c0_18 = arith.constant 0 : index
      %c0_19 = arith.constant 0 : index
      %21 = vector.load %arg6[%c0_18, %c0_19] : memref<2x1xf32, #tpu.memory_space<vmem>>, vector<2x1xf32>
      %22 = tpu.reciprocal %21 {approx = true} : vector<2x1xf32> -> vector<2x1xf32>
      %23 = vector.broadcast %22 : vector<2x1xf32> to vector<2x128xf32>
      %24 = arith.mulf %20, %23 : vector<2x128xf32>
      %25 = arith.mulf %24, %24 : vector<2x128xf32>
      %cst_20 = arith.constant dense<0.000000e+00> : vector<2xf32>
      %26 = vector.multi_reduction <add>, %25, %cst_20 [1] : vector<2x128xf32> to vector<2xf32>
      %27 = vector.shape_cast %26 : vector<2xf32> to vector<2x1xf32>
      %cst_21 = arith.constant 1.000000e-24 : f32
      %28 = vector.broadcast %cst_21 : f32 to vector<2x1xf32>
      %29 = arith.maximumf %27, %28 : vector<2x1xf32>
      %30 = math.rsqrt %29 : vector<2x1xf32>
      %31 = vector.broadcast %30 : vector<2x1xf32> to vector<2x128xf32>
      %32 = arith.mulf %24, %31 : vector<2x128xf32>
      %c0_22 = arith.constant 0 : index
      %c0_23 = arith.constant 0 : index
      %33 = vector.load %arg4[%c0_22, %c0_23] : memref<2x128xf32, #tpu.memory_space<vmem>>, vector<2x128xf32>
      tpu.vector_store %arg4[%c0_22, %c0_23], %32 {strides = array<i32>} : memref<2x128xf32, #tpu.memory_space<vmem>>, vector<2x128xf32>,
    } else {
    }
    return
  }
  func.func @transform_0(%arg0: i32, %arg1: i32) -> (i32, i32, i32) {
    %c0_i32 = arith.constant 0 : i32
    %c0_i32_0 = arith.constant 0 : i32
    return %arg0, %arg1, %c0_i32 : i32, i32, i32
  }
  func.func @transform_1(%arg0: i32, %arg1: i32) -> (i32, i32, i32) {
    %c0_i32 = arith.constant 0 : i32
    %c0_i32_0 = arith.constant 0 : i32
    return %arg0, %arg1, %c0_i32 : i32, i32, i32
  }
  func.func @transform_2(%arg0: i32, %arg1: i32) -> (i32, i32) {
    %c0_i32 = arith.constant 0 : i32
    %c0_i32_0 = arith.constant 0 : i32
    return %arg0, %c0_i32 : i32, i32
  }
}

</mosaic_0001>

<llo_original>
// kernel: tpu_custom_call.1
$region0: #{tpu_custom_call.1}
  #allocation0 [shape = 'u32[]', space=smem, size = 0x4, offset = 0x4, fixed_abs, tag = 'smem constant byte address 0x4 - core index']
  #allocation1 [shape = 'u32[144,128]{1,0:T(1,128)}', space=vmem, size = 0x12000, scoped, tag = 'internal scratch']
  #allocation2 [shape = 'f32[2,128]{1,0:T(2,128)}', space=vmem, size = 0x400, scoped, tag = 'scratch operand']
  #allocation3 [shape = 'f32[2,1]{1,0:T(2,128)}', space=vmem, size = 0x400, scoped, tag = 'scratch operand']
  %s0 = inlined_call_operand.vmem [shape: bf16[2,16,128], index: 0, kind: input, shape index: {}]
  %s1 = inlined_call_operand.vmem [shape: bf16[2,16,1], index: 1, kind: input, shape index: {}]
  %s2 = inlined_call_operand.hbm [shape: f32[2,128], index: 2, kind: output, shape index: {}]
  %s3 = sld [smem:[#allocation0]]
  $region131: #{tpu_custom_call.1} parent=0
    _
  %s5 = ssub.s32 1, %s3
  %s6 = scalar_select 0, %s5, %s3
  $region1: #{tpu_custom_call.1} parent=0
    #allocation4 [shape = 'u8[8192]{0}', space=vmem, size = 0x2000, scoped, tag = 'input window, operand 0']
    #allocation5 [shape = 'u8[8192]{0}', space=vmem, size = 0x2000, scoped, tag = 'input window, operand 1']
    #allocation6 [shape = 'u8[1024]{0}', space=vmem, size = 0x400, scoped, tag = 'output window, operand 0, single buffered']
    #allocation7 [shape = 's32[2]{0}', space=sflag, size = 0x8, scoped, tag = 'scoped memory for tpu_custom_call.1']
    %7 = vsyncpa [#allocation7], 0
    loop: start=0, step=1, limit=4
    $region2: #{tpu_custom_call.1} parent=1 // loop_pre_header
      _
    $region3: #{tpu_custom_call.1} parent=1 // loop_header
      %s9 = sphi 0, %s13
      %p10 = scmp.ge.s32.totalorder %s9, 4
      %s16 = sphi 0, %s28
      %s17 = sphi 0, %s24
      %s18 = sphi 0, %s16
      %s19 = sphi 0, %s17
      %s20 = sphi 0, %s18
      %s21 = sphi 0, %s19
      %s33 = sphi 0, %s35
      %s36 = sphi 0, %s33
      %s37 = sphi 0, %s36
      %s53 = sphi 0, %s37
      %s61 = sphi 0, %s63
      %s64 = sphi 0, %s61
      %s65 = sphi 0, %s64
      %s81 = sphi 0, %s65
      %s87 = sphi 0, %s89
      %s90 = sphi 0, %s87
      %s91 = sphi 0, %s90
      %s107 = sphi 0, %s91
    $region4: #{tpu_custom_call.1} parent=1 // loop_header_branch
      %12 = sbr.rel (%p10) target = $region8
    $region5: #{tpu_custom_call.1} parent=1 // loop_body
      %s14 = ssub.s32 %s9, 1
      %s15 = ssub.s32 %s9, 2
      %s22 = sadd.s32 1, %s17
      %p23 = scmp.ge.s32.totalorder %s22, 2
      %s24 = scalar_select %p23, 0, %s22
      %s25 = sadd.s32 1, %s16
      %s26 = scalar_select %p23, %s25, %s16
      %p27 = scmp.ge.s32.totalorder %s26, 1
      %s28 = scalar_select %p27, 0, %s26
      %s29 = ssub.s32 %s16, %s28
      %s30 = ssub.s32 %s17, %s24
      %s31 = sor.u32 %s29, %s30
      %p32 = scmp.eq.s32.totalorder %s31, 0
      %s34 = sadd.s32 %s33, 1
      %s35 = scalar_select %p32, %s33, %s34
      %p38 = pneg %p32
      %p39 = scmp.eq.s32.totalorder %s9, 1
      %p40 = por %p38, %p39
      %p41 = scmp.ne.s32.totalorder %s33, %s36
      %p42 = scmp.eq.s32.totalorder %s9, 0
      %p43 = por %p41, %p42
      %p44 = scmp.ne.s32.totalorder %s33, %s36
      %p45 = scmp.eq.s32.totalorder %s14, 1
      %p46 = por %p44, %p45
      %p47 = scmp.ne.s32.totalorder %s36, %s37
      %p48 = scmp.eq.s32.totalorder %s14, 0
      %p49 = por %p47, %p48
      %p50 = scmp.ne.s32.totalorder %s36, %s37
      %p51 = scmp.eq.s32.totalorder %s15, 1
      %p52 = por %p50, %p51
      %p54 = scmp.ne.s32.totalorder %s37, %s53
      %p55 = scmp.eq.s32.totalorder %s15, 0
      %p56 = por %p54, %p55
      %s57 = ssub.s32 %s16, %s28
      %s58 = ssub.s32 %s17, %s24
      %s59 = sor.u32 %s57, %s58
      %p60 = scmp.eq.s32.totalorder %s59, 0
      %s62 = sadd.s32 %s61, 1
      %s63 = scalar_select %p60, %s61, %s62
      %p66 = pneg %p60
      %p67 = scmp.eq.s32.totalorder %s9, 1
      %p68 = por %p66, %p67
      %p69 = scmp.ne.s32.totalorder %s61, %s64
      %p70 = scmp.eq.s32.totalorder %s9, 0
      %p71 = por %p69, %p70
      %p72 = scmp.ne.s32.totalorder %s61, %s64
      %p73 = scmp.eq.s32.totalorder %s14, 1
      %p74 = por %p72, %p73
      %p75 = scmp.ne.s32.totalorder %s64, %s65
      %p76 = scmp.eq.s32.totalorder %s14, 0
      %p77 = por %p75, %p76
      %p78 = scmp.ne.s32.totalorder %s64, %s65
      %p79 = scmp.eq.s32.totalorder %s15, 1
      %p80 = por %p78, %p79
      %p82 = scmp.ne.s32.totalorder %s65, %s81
      %p83 = scmp.eq.s32.totalorder %s15, 0
      %p84 = por %p82, %p83
      %s85 = ssub.s32 %s16, %s28
      %p86 = scmp.eq.s32.totalorder %s85, 0
      %s88 = sadd.s32 %s87, 1
      %s89 = scalar_select %p86, %s87, %s88
      %p92 = pneg %p86
      %p93 = scmp.eq.s32.totalorder %s9, 1
      %p94 = por %p92, %p93
      %p95 = scmp.ne.s32.totalorder %s87, %s90
      %p96 = scmp.eq.s32.totalorder %s9, 0
      %p97 = por %p95, %p96
      %p98 = scmp.ne.s32.totalorder %s87, %s90
      %p99 = scmp.eq.s32.totalorder %s14, 1
      %p100 = por %p98, %p99
      %p101 = scmp.ne.s32.totalorder %s90, %s91
      %p102 = scmp.eq.s32.totalorder %s14, 0
      %p103 = por %p101, %p102
      %p104 = scmp.ne.s32.totalorder %s90, %s91
      %p105 = scmp.eq.s32.totalorder %s15, 1
      %p106 = por %p104, %p105
      %p108 = scmp.ne.s32.totalorder %s91, %s107
      %p109 = scmp.eq.s32.totalorder %s15, 0
      %p110 = por %p108, %p109
      %p111 = scmp.le.s32.totalorder 1, %s9
      %p112 = scmp.lt.s32.totalorder %s9, 3
      %p113 = pnand %p111, %p112
      %p114 = pneg %p113
      // Predicated region
      $region9: #{tpu_custom_call.1} parent=5 // pred_check
        _
      $region10: #{tpu_custom_call.1} parent=5 // pred_check_branch
        %116 = sbr.rel (%p113) target = $region12
      $region11: #{tpu_custom_call.1} parent=5 // pred_region
        %s117 = ssub.s32 %s9, 1
      $region12: #{tpu_custom_call.1} parent=5 // pred_fallthru
        _
      %p118 = scmp.lt.s32.totalorder %s9, 2
      // Predicated region
      $region13: #{tpu_custom_call.1} parent=5 // pred_check
        %p119 = pneg %p118
      $region14: #{tpu_custom_call.1} parent=5 // pred_check_branch
        %121 = sbr.rel (%p119) target = $region16
      $region15: #{tpu_custom_call.1} parent=5 // pred_region
        // Predicated region
        $region17: #{tpu_custom_call.1} parent=15 // pred_check
          %p122 = pneg %p43
        $region18: #{tpu_custom_call.1} parent=15 // pred_check_branch
          %124 = sbr.rel (%p122) target = $region20
        $region19: #{tpu_custom_call.1} parent=15 // pred_region
          %s125 = sand.u32 %s33, 1
          %s126 = sand.u32 %s33, 1
          %s127 = smul.addr %s126, 8
          %s128 = scalar_lea.vmem [#allocation4], %s127
          %s129 = smul.u32 2, %s16
          %s130 = smul.addr %s129, 2
          %s131 = sadd.s32 %s17, %s130
          %s132 = smul.addr %s131, 4
          %s133 = scalar_lea.vmem %s0, %s132
          // Predicated region
          $region21: #{tpu_custom_call.1} parent=19 // pred_check
            _
          $region22: #{tpu_custom_call.1} parent=19 // pred_check_branch
            %135 = sbr.rel (0) target = $region24
          $region23: #{tpu_custom_call.1} parent=19 // pred_region
            // Predicated region
            $region25: #{tpu_custom_call.1} parent=23 // pred_check
              _
            $region26: #{tpu_custom_call.1} parent=23 // pred_check_branch
              %137 = sbr.rel target = $region28
            $region27: #{tpu_custom_call.1} parent=23 // pred_region
              // Predicated region
              $region40: #{tpu_custom_call.1} parent=27 // pred_check
                _
              $region41: #{tpu_custom_call.1} parent=27 // pred_check_branch
                %154 = sbr.rel (0) target = $region43
              $region42: #{tpu_custom_call.1} parent=27 // pred_region
                loop: start=0, step=1, limit=1
                $region44: #{tpu_custom_call.1} parent=42 // loop_pre_header
                  _
                $region45: #{tpu_custom_call.1} parent=42 // loop_header
                  %s156 = sphi 0, %s160
                  %p157 = scmp.ge.s32.totalorder %s156, 1
                  %s161 = sphi %s133, %s133
                  %s162 = sphi %s128, %s128
                $region46: #{tpu_custom_call.1} parent=42 // loop_header_branch
                  %159 = sbr.rel (%p157) target = $region50
                $region47: #{tpu_custom_call.1} parent=42 // loop_body
                  _
                $region48: #{tpu_custom_call.1} parent=42 // loop_footer
                  %s160 = sadd.s32 1, %s156
                $region49: #{tpu_custom_call.1} parent=42 // loop_footer_branch
                  %155 = sbr.rel target = $region45
                $region50: #{tpu_custom_call.1} parent=42 // loop_exit
                  _
                loop: start=0, step=1, limit=1
                $region51: #{tpu_custom_call.1} parent=42 // loop_pre_header
                  _
                $region52: #{tpu_custom_call.1} parent=42 // loop_header
                  %s165 = sphi 0, %s169
                  %p166 = scmp.ge.s32.totalorder %s165, 1
                  %s170 = sphi %s133, %s133
                  %s171 = sphi %s128, %s128
                $region53: #{tpu_custom_call.1} parent=42 // loop_header_branch
                  %168 = sbr.rel (%p166) target = $region57
                $region54: #{tpu_custom_call.1} parent=42 // loop_body
                  %v172 = vld [vmem:[%s170] sm:$0xf]
                  %173 = vst [vmem:[%s171] sm:$0xf] %v172
                  %v174 = vld [vmem:[%s170 + $0x8] sm:$0xf]
                  %175 = vst [vmem:[%s171 + $0x4] sm:$0xf] %v174
                $region55: #{tpu_custom_call.1} parent=42 // loop_footer
                  %s169 = sadd.s32 1, %s165
                $region56: #{tpu_custom_call.1} parent=42 // loop_footer_branch
                  %164 = sbr.rel target = $region52
                $region57: #{tpu_custom_call.1} parent=42 // loop_exit
                  _
              $region43: #{tpu_custom_call.1} parent=27 // pred_fallthru
                _
            $region28: #{tpu_custom_call.1} parent=23 // pred_fallthru
              _
            // Predicated region
            $region29: #{tpu_custom_call.1} parent=23 // pred_check
              _
            $region30: #{tpu_custom_call.1} parent=23 // pred_check_branch
              %139 = sbr.rel (0) target = $region32
            $region31: #{tpu_custom_call.1} parent=23 // pred_region
              loop: start=0, step=1, limit=1
              $region33: #{tpu_custom_call.1} parent=31 // loop_pre_header
                _
              $region34: #{tpu_custom_call.1} parent=31 // loop_header
                %s142 = sphi 0, %s146
                %p143 = scmp.ge.s32.totalorder %s142, 1
                %s147 = sphi %s133, %s133
                %s148 = sphi %s128, %s128
              $region35: #{tpu_custom_call.1} parent=31 // loop_header_branch
                %145 = sbr.rel (%p143) target = $region39
              $region36: #{tpu_custom_call.1} parent=31 // loop_body
                %v149 = vld [vmem:[%s147] sm:$0xf]
                %150 = vst [vmem:[%s148] sm:$0xf] %v149
                %v151 = vld [vmem:[%s147 + $0x8] sm:$0xf]
                %152 = vst [vmem:[%s148 + $0x4] sm:$0xf] %v151
              $region37: #{tpu_custom_call.1} parent=31 // loop_footer
                %s146 = sadd.s32 1, %s142
              $region38: #{tpu_custom_call.1} parent=31 // loop_footer_branch
                %141 = sbr.rel target = $region34
              $region39: #{tpu_custom_call.1} parent=31 // loop_exit
                _
            $region32: #{tpu_custom_call.1} parent=23 // pred_fallthru
              _
          $region24: #{tpu_custom_call.1} parent=19 // pred_fallthru
            _
          %176 = vnop
        $region20: #{tpu_custom_call.1} parent=15 // pred_fallthru
          _
        // Predicated region
        $region58: #{tpu_custom_call.1} parent=15 // pred_check
          %p177 = pneg %p71
        $region59: #{tpu_custom_call.1} parent=15 // pred_check_branch
          %179 = sbr.rel (%p177) target = $region61
        $region60: #{tpu_custom_call.1} parent=15 // pred_region
          %s180 = sand.u32 %s61, 1
          %s181 = sand.u32 %s61, 1
          %s182 = smul.addr %s181, 8
          %s183 = scalar_lea.vmem [#allocation5], %s182
          %s184 = smul.u32 2, %s16
          %s185 = smul.addr %s184, 2
          %s186 = sadd.s32 %s17, %s185
          %s187 = smul.addr %s186, 4
          %s188 = scalar_lea.vmem %s1, %s187
          // Predicated region
          $region62: #{tpu_custom_call.1} parent=60 // pred_check
            _
          $region63: #{tpu_custom_call.1} parent=60 // pred_check_branch
            %190 = sbr.rel (0) target = $region65
          $region64: #{tpu_custom_call.1} parent=60 // pred_region
            // Predicated region
            $region66: #{tpu_custom_call.1} parent=64 // pred_check
              _
            $region67: #{tpu_custom_call.1} parent=64 // pred_check_branch
              %192 = sbr.rel target = $region69
            $region68: #{tpu_custom_call.1} parent=64 // pred_region
              // Predicated region
              $region81: #{tpu_custom_call.1} parent=68 // pred_check
                _
              $region82: #{tpu_custom_call.1} parent=68 // pred_check_branch
                %209 = sbr.rel (0) target = $region84
              $region83: #{tpu_custom_call.1} parent=68 // pred_region
                loop: start=0, step=1, limit=1
                $region85: #{tpu_custom_call.1} parent=83 // loop_pre_header
                  _
                $region86: #{tpu_custom_call.1} parent=83 // loop_header
                  %s211 = sphi 0, %s215
                  %p212 = scmp.ge.s32.totalorder %s211, 1
                  %s216 = sphi %s188, %s188
                  %s217 = sphi %s183, %s183
                $region87: #{tpu_custom_call.1} parent=83 // loop_header_branch
                  %214 = sbr.rel (%p212) target = $region91
                $region88: #{tpu_custom_call.1} parent=83 // loop_body
                  _
                $region89: #{tpu_custom_call.1} parent=83 // loop_footer
                  %s215 = sadd.s32 1, %s211
                $region90: #{tpu_custom_call.1} parent=83 // loop_footer_branch
                  %210 = sbr.rel target = $region86
                $region91: #{tpu_custom_call.1} parent=83 // loop_exit
                  _
                loop: start=0, step=1, limit=1
                $region92: #{tpu_custom_call.1} parent=83 // loop_pre_header
                  _
                $region93: #{tpu_custom_call.1} parent=83 // loop_header
                  %s220 = sphi 0, %s224
                  %p221 = scmp.ge.s32.totalorder %s220, 1
                  %s225 = sphi %s188, %s188
                  %s226 = sphi %s183, %s183
                $region94: #{tpu_custom_call.1} parent=83 // loop_header_branch
                  %223 = sbr.rel (%p221) target = $region98
                $region95: #{tpu_custom_call.1} parent=83 // loop_body
                  %v227 = vld [vmem:[%s225] sm:$0xf]
                  %228 = vst [vmem:[%s226] sm:$0xf] %v227
                  %v229 = vld [vmem:[%s225 + $0x8] sm:$0xf]
                  %230 = vst [vmem:[%s226 + $0x4] sm:$0xf] %v229
                $region96: #{tpu_custom_call.1} parent=83 // loop_footer
                  %s224 = sadd.s32 1, %s220
                $region97: #{tpu_custom_call.1} parent=83 // loop_footer_branch
                  %219 = sbr.rel target = $region93
                $region98: #{tpu_custom_call.1} parent=83 // loop_exit
                  _
              $region84: #{tpu_custom_call.1} parent=68 // pred_fallthru
                _
            $region69: #{tpu_custom_call.1} parent=64 // pred_fallthru
              _
            // Predicated region
            $region70: #{tpu_custom_call.1} parent=64 // pred_check
              _
            $region71: #{tpu_custom_call.1} parent=64 // pred_check_branch
              %194 = sbr.rel (0) target = $region73
            $region72: #{tpu_custom_call.1} parent=64 // pred_region
              loop: start=0, step=1, limit=1
              $region74: #{tpu_custom_call.1} parent=72 // loop_pre_header
                _
              $region75: #{tpu_custom_call.1} parent=72 // loop_header
                %s197 = sphi 0, %s201
                %p198 = scmp.ge.s32.totalorder %s197, 1
                %s202 = sphi %s188, %s188
                %s203 = sphi %s183, %s183
              $region76: #{tpu_custom_call.1} parent=72 // loop_header_branch
                %200 = sbr.rel (%p198) target = $region80
              $region77: #{tpu_custom_call.1} parent=72 // loop_body
                %v204 = vld [vmem:[%s202] sm:$0xf]
                %205 = vst [vmem:[%s203] sm:$0xf] %v204
                %v206 = vld [vmem:[%s202 + $0x8] sm:$0xf]
                %207 = vst [vmem:[%s203 + $0x4] sm:$0xf] %v206
              $region78: #{tpu_custom_call.1} parent=72 // loop_footer
                %s201 = sadd.s32 1, %s197
              $region79: #{tpu_custom_call.1} parent=72 // loop_footer_branch
                %196 = sbr.rel target = $region75
              $region80: #{tpu_custom_call.1} parent=72 // loop_exit
                _
            $region73: #{tpu_custom_call.1} parent=64 // pred_fallthru
              _
          $region65: #{tpu_custom_call.1} parent=60 // pred_fallthru
            _
          %231 = vnop
        $region61: #{tpu_custom_call.1} parent=15 // pred_fallthru
          _
      $region16: #{tpu_custom_call.1} parent=5 // pred_fallthru
        _
      %p232 = scmp.le.s32.totalorder 1, %s9
      %p233 = scmp.lt.s32.totalorder %s9, 3
      %p234 = pnand %p232, %p233
      %p235 = pneg %p234
      // Predicated region
      $region99: #{tpu_custom_call.1} parent=5 // pred_check
        _
      $region100: #{tpu_custom_call.1} parent=5 // pred_check_branch
        %237 = sbr.rel (%p234) target = $region102
      $region101: #{tpu_custom_call.1} parent=5 // pred_region
        %s238 = ssub.s32 %s9, 1
        %s239 = sand.u32 %s36, 1
        %s240 = sand.u32 %s36, 1
        %s241 = smul.addr %s240, 8
        %s242 = scalar_lea.vmem [#allocation4], %s241
        // Predicated region
        $region103: #{tpu_custom_call.1} parent=101 // pred_check
          %p243 = pneg %p49
        $region104: #{tpu_custom_call.1} parent=101 // pred_check_branch
          %245 = sbr.rel (%p243) target = $region106
        $region105: #{tpu_custom_call.1} parent=101 // pred_region
          _
        $region106: #{tpu_custom_call.1} parent=101 // pred_fallthru
          _
        %s246 = sand.u32 %s64, 1
        %s247 = sand.u32 %s64, 1
        %s248 = smul.addr %s247, 8
        %s249 = scalar_lea.vmem [#allocation5], %s248
        // Predicated region
        $region107: #{tpu_custom_call.1} parent=101 // pred_check
          %p250 = pneg %p77
        $region108: #{tpu_custom_call.1} parent=101 // pred_check_branch
          %252 = sbr.rel (%p250) target = $region110
        $region109: #{tpu_custom_call.1} parent=101 // pred_region
          _
        $region110: #{tpu_custom_call.1} parent=101 // pred_fallthru
          _
        %s253 = sand.u32 %s36, 1
        %s254 = sand.u32 %s36, 1
        %s255 = smul.addr %s254, 8
        %s256 = scalar_lea.vmem [#allocation4], %s255
        %p257 = pneg %p49
        %p258 = pneg %p46
        %s259 = sand.u32 %s64, 1
        %s260 = sand.u32 %s64, 1
        %s261 = smul.addr %s260, 8
        %s262 = scalar_lea.vmem [#allocation5], %s261
        %p263 = pneg %p77
        %p264 = pneg %p74
        %p265 = pneg %p103
        %p266 = pneg %p100
        %s267 = smul.u32 2, %s18
        %s268 = smul.u32 2, %s18
        %p269 = scmp.eq.s32.totalorder %s19, 0
        // Predicated region
        $region111: #{tpu_custom_call.1} parent=101 // pred_check
          %p270 = pneg %p269
        $region112: #{tpu_custom_call.1} parent=101 // pred_check_branch
          %272 = sbr.rel (%p270) target = $region114
        $region113: #{tpu_custom_call.1} parent=101 // pred_region
          %273 = vst [vmem:[#allocation2] sm:$0x3] 0.0
          %vm274 = vcmask 1024
          %275 = vst.msk [vmem:[#allocation3] sm:$0x3] %vm274, 0.0
        $region114: #{tpu_custom_call.1} parent=101 // pred_fallthru
          _
        %v276 = vld [vmem:[%s242] sm:$0xf]
        %v277 = vld [vmem:[%s242 + $0x4] sm:$0xf]
        %v278 = vld [vmem:[%s249] sm:$0xf]
        %v279 = vld [vmem:[%s249 + $0x4] sm:$0xf]
        %281 = vset.pattern.permute.xlu0 0
        %282 = vperm.xlu0 %281, %v278
        %v283 = vpop.permute.xlu0 %282
        %v286 = vunpack.c.l.s4 839922192
        %v287 = vunpack.c.0.s8 %v286
        %v288 = vlaneseq
        %v289 = vshrl.u32 %v288, 7
        %v290 = vsub.s32 %v287, %v289
        %v291 = vrot.slane %v283, %v290
        %293 = vset.pattern.permute.xlu0 0
        %294 = vperm.xlu0 %293, %v279
        %v295 = vpop.permute.xlu0 %294
        %v298 = vunpack.c.l.s4 839922192
        %v299 = vunpack.c.0.s8 %v298
        %v300 = vlaneseq
        %v301 = vshrl.u32 %v300, 7
        %v302 = vsub.s32 %v299, %v301
        %v303 = vrot.slane %v295, %v302
        %v304 = vmul.bf16 %v276, %v291
        %v305 = vmul.bf16 %v277, %v303
        %v306 = vunpack.c.l.bf16 %v304
        %v307 = vunpack.c.l.bf16 %v305
        %v308 = vld [vmem:[#allocation2] sm:$0x3]
        %v309 = vrot.slane %v306, 4
        %v310 = vadd.f32 %v306, %v309
        %v311 = vrot.slane %v310, 2
        %v312 = vadd.f32 %v310, %v311
        %v313 = vrot.slane %v312, 1
        %v314 = vadd.f32 %v312, %v313
        %v315 = vrot.slane %v307, 4
        %v316 = vadd.f32 %v307, %v315
        %v317 = vrot.slane %v316, 2
        %v318 = vadd.f32 %v316, %v317
        %v319 = vrot.slane %v318, 1
        %v320 = vadd.f32 %v318, %v319
        %vm323 = vcmask 1041409
        %v324 = vsel %vm323, %v320, %v314
        %v326 = vadd.f32 %v308, %v324
        %327 = vst [vmem:[#allocation2] sm:$0x3] %v326
        %v328 = vld [vmem:[#allocation3] sm:$0x3]
        %v329 = vunpack.c.l.bf16 %v278
        %v330 = vunpack.c.l.bf16 %v279
        %vm331 = vcmask 7168
        %v332 = vsel %vm331, %v329, 0.0
        %v333 = vrot.slane %v332, 4
        %v334 = vadd.f32 %v332, %v333
        %v335 = vrot.slane %v334, 2
        %v336 = vadd.f32 %v334, %v335
        %v337 = vrot.slane %v336, 1
        %v338 = vadd.f32 %v336, %v337
        %v339 = vsel %vm331, %v330, 0.0
        %v340 = vrot.slane %v339, 4
        %v341 = vadd.f32 %v339, %v340
        %v342 = vrot.slane %v341, 2
        %v343 = vadd.f32 %v341, %v342
        %v344 = vrot.slane %v343, 1
        %v345 = vadd.f32 %v343, %v344
        %v348 = vsel %vm323, %v345, %v338
        %v350 = vadd.f32 %v328, %v348
        %vm351 = vcmask 1024
        %352 = vst.msk [vmem:[#allocation3] sm:$0x3] %vm351, %v350
        %p353 = scmp.eq.s32.totalorder %s19, 1
        // Predicated region
        $region115: #{tpu_custom_call.1} parent=101 // pred_check
          %p354 = pneg %p353
        $region116: #{tpu_custom_call.1} parent=101 // pred_check_branch
          %356 = sbr.rel (%p354) target = $region118
        $region117: #{tpu_custom_call.1} parent=101 // pred_region
          %v357 = vld [vmem:[#allocation2] sm:$0x3]
          %v358 = vld [vmem:[#allocation3] sm:$0x3]
          %v359 = vrcp.pop %v358
          %361 = vset.pattern.permute.xlu0 0
          %362 = vperm.xlu0 %361, %v359
          %v363 = vpop.permute.xlu0 %362
          %v365 = vmul.f32 %v357, %v363
          %v366 = vmul.f32 %v365, %v365
          %vm367 = vcmask 1041408
          %v368 = vsel %vm367, %v366, 0.0
          %369 = vadd.xlane.f32.xlu0 %v368
          %v370 = vpop.xlane.xlu0 %369
          %v371 = vmax.f32 %v370, 1e-24
          %v372 = vrsqrt.pop %v371
          %v373 = vmul.f32 %v365, %v372
          %374 = vst [vmem:[#allocation6] sm:$0x3] %v373
        $region118: #{tpu_custom_call.1} parent=101 // pred_fallthru
          _
        // Predicated region
        $region119: #{tpu_custom_call.1} parent=101 // pred_check
          %p375 = pneg %p100
        $region120: #{tpu_custom_call.1} parent=101 // pred_check_branch
          %377 = sbr.rel (%p375) target = $region122
        $region121: #{tpu_custom_call.1} parent=101 // pred_region
          %s379 = ssub.s32 32, 32
          %380 = vsyncadd [#allocation7], %s379
          %s381 = smul.addr %s18, 32
          %s382 = scalar_lea.hbm %s2, %s381
          %s384 = sshll.u32 [#allocation6], 4
          %s385 = int_to_ptr.vmem [resolvable:$true] %s384
          %387 = dma.vmem_to_hbm [thread:$0]  %s385, 32, %s382, [#allocation7]
        $region122: #{tpu_custom_call.1} parent=101 // pred_fallthru
          _
        // Predicated region
        $region123: #{tpu_custom_call.1} parent=101 // pred_check
          %p388 = pneg %p100
        $region124: #{tpu_custom_call.1} parent=101 // pred_check_branch
          %390 = sbr.rel (%p388) target = $region126
        $region125: #{tpu_custom_call.1} parent=101 // pred_region
          %391 = dma.done [#allocation7], 32
        $region126: #{tpu_custom_call.1} parent=101 // pred_fallthru
          _
      $region102: #{tpu_custom_call.1} parent=5 // pred_fallthru
        _
      %p392 = scmp.le.s32.totalorder 2, %s9
      // Predicated region
      $region127: #{tpu_custom_call.1} parent=5 // pred_check
        %p393 = pneg %p392
      $region128: #{tpu_custom_call.1} parent=5 // pred_check_branch
        %395 = sbr.rel (%p393) target = $region130
      $region129: #{tpu_custom_call.1} parent=5 // pred_region
        %s396 = ssub.s32 %s9, 2
      $region130: #{tpu_custom_call.1} parent=5 // pred_fallthru
        _
    $region6: #{tpu_custom_call.1} parent=1 // loop_footer
      %s13 = sadd.s32 1, %s9
    $region7: #{tpu_custom_call.1} parent=1 // loop_footer_branch
      %8 = sbr.rel target = $region3
    $region8: #{tpu_custom_call.1} parent=1 // loop_exit
      _
    %397 = vsyncpa [#allocation7], 1
    %s398 = scalar_lea.sflag [#allocation7], 1
    %399 = vsyncpa %s398, 1

</llo_original>
